<compile_context>
chip_gen: v6e
topology: v6e:2x2x1
jax: 0.10.0
libtpu: 0.0.40
codegen_flags: <defaults>
</compile_context>

<pallas_src>
import functools
import math

import jax
import jax.numpy as jnp
from jax.experimental import pallas as pl
from jax.experimental.pallas import tpu as pltpu


_SUBLANE = 8                     # f32 sublane height
_LANE = 128                      # lane width
_MAX_TILE_B = 1024               # max batch rows per grid step
_DEFAULT_SCOPED_VMEM = 32 * 1024 * 1024


def _round_up(n, m):
    return ((n + m - 1) // m) * m


def _pick_tile_b(batch):
    """Batch tile: multiple of 8 (or == batch), <= _MAX_TILE_B, and producing
    >= 2 tiles whenever the batch is big enough to split (feeds both v7x TCs).
    Waste is at most one partial boundary tile (masked), never a full round-up
    of the batch."""
    if batch <= _SUBLANE:
        return batch                                    # full-extent block
    if batch <= 2 * _MAX_TILE_B:
        # ~half the batch rounded to a sublane multiple -> 2 tiles.
        return min(_round_up(pl.cdiv(batch, 2), _SUBLANE), _MAX_TILE_B)
    return _MAX_TILE_B


def _padded_tile_bytes(rows, cols, dtype):
    """Conservative VMEM footprint of one buffered tile ((8,128)-padded)."""
    return (_round_up(max(int(rows), 1), _SUBLANE)
            * _round_up(max(int(cols), 1), _LANE)
            * jnp.dtype(dtype).itemsize)


def _fused_mlp_kernel(x_ref, *refs, apply_relu):
    """Whole MLP for one batch tile.  refs = (w1, b1, ..., wn, bn, out).

    Weights/biases are VMEM-resident (constant index_map); the hidden
    activation never leaves VMEM/vregs.
    """
    o_ref = refs[-1]
    wb_refs = refs[:-1]
    n_layers = len(wb_refs) // 2

    h = x_ref[...]
    for l in range(n_layers):                           # unrolled at trace time
        w = wb_refs[2 * l][...]                         # (d_in, d_out), bf16
        b = wb_refs[2 * l + 1][...]                     # (1, d_out), f32
        # bf16 x bf16 products, f32 MXU accumulation; bias-add / ReLU in f32.
        h = jnp.dot(h.astype(w.dtype), w, preferred_element_type=jnp.float32)
        h = h + b.astype(jnp.float32)
        if apply_relu[l]:
            h = jnp.maximum(h, 0.0)
    o_ref[...] = h.astype(o_ref.dtype)


def init_mlp_params(key, dims, weight_dtype=jnp.bfloat16):
    """nn.Linear-style init: U(-1/sqrt(fan_in), 1/sqrt(fan_in)).

    Weights stored transposed (d_in, d_out) so the kernel computes x @ W and
    cast once (at init time) to `weight_dtype`; biases stay f32.
    """
    params = []
    for d_in, d_out in zip(dims[:-1], dims[1:]):
        key, kw, kb = jax.random.split(key, 3)
        bound = 1.0 / math.sqrt(d_in)
        w = jax.random.uniform(kw, (d_in, d_out), jnp.float32, -bound, bound)
        b = jax.random.uniform(kb, (d_out,), jnp.float32, -bound, bound)
        params.append((w.astype(weight_dtype),
                       b.reshape(1, -1).astype(jnp.float32)))
    return params


def mlp_forward(x, params, dims):
    """y = MLP(x) for x of shape (..., dims[0]); returns (..., dims[-1])."""
    n_layers = len(params)
    assert n_layers == len(dims) - 1
    assert x.shape[-1] == dims[0]

    lead_shape = x.shape[:-1]
    x2 = x.reshape(-1, dims[0])
    B = x2.shape[0]
    out_dtype = x2.dtype

    # Reference quirk: is_last = ind >= len(dims) - 1 is never True, so a ReLU
    # follows every Linear (including the last one).
    apply_relu = tuple(not (ind >= len(dims) - 1) for ind in range(n_layers))

    tile_b = _pick_tile_b(B)
    grid = (pl.cdiv(B, tile_b),)

    # ---- BlockSpecs: real (unpadded) shapes; weights/biases resident --------
    in_specs = [pl.BlockSpec((tile_b, dims[0]), lambda i: (i, 0))]
    flat_wb = []
    for (w, b) in params:
        in_specs.append(pl.BlockSpec(w.shape, lambda i: (0, 0)))
        in_specs.append(pl.BlockSpec(b.shape, lambda i: (0, 0)))
        flat_wb += [w, b]
    out_spec = pl.BlockSpec((tile_b, dims[-1]), lambda i: (i, 0))

    # ---- advisory cost estimate: real (unpadded) FLOPs / HBM bytes ----------
    flops = 2 * B * sum(dims[l] * dims[l + 1] for l in range(n_layers))
    bytes_accessed = (
        x2.size * x2.dtype.itemsize
        + sum(w.size * w.dtype.itemsize + b.size * b.dtype.itemsize
              for w, b in params)
        + B * dims[-1] * jnp.dtype(out_dtype).itemsize
    )
    cost = pl.CostEstimate(flops=flops, transcendentals=0,
                           bytes_accessed=bytes_accessed)

    # ---- VMEM budget: tiles double-buffered + resident weights + hidden -----
    vmem_bytes = 2 * _padded_tile_bytes(tile_b, dims[0], x2.dtype)
    vmem_bytes += 2 * _padded_tile_bytes(tile_b, dims[-1], out_dtype)
    for l, (w, b) in enumerate(params):
        vmem_bytes += 2 * _padded_tile_bytes(w.shape[0], w.shape[1], w.dtype)
        vmem_bytes += 2 * _padded_tile_bytes(b.shape[0], b.shape[1], b.dtype)
        vmem_bytes += _padded_tile_bytes(tile_b, dims[l + 1], jnp.float32)
    vmem_limit = None
    if 2 * vmem_bytes > _DEFAULT_SCOPED_VMEM:          # only raise above default
        vmem_limit = min(2 * vmem_bytes, 100 * 1024 * 1024)

    kernel = functools.partial(_fused_mlp_kernel, apply_relu=apply_relu)
    out = pl.pallas_call(
        kernel,
        out_shape=jax.ShapeDtypeStruct((B, dims[-1]), out_dtype),
        grid=grid,
        in_specs=in_specs,
        out_specs=out_spec,
        compiler_params=pltpu.CompilerParams(
            dimension_semantics=("parallel",),         # batch tiles -> 2 TCs on v7x
            vmem_limit_bytes=vmem_limit,
        ),
        cost_estimate=cost,
    )(x2, *flat_wb)

    return out.reshape(*lead_shape, dims[-1])


if __name__ == "__main__":
    dims = [16, 32, 8]   # MLP([16, 32, 8]): Linear(16,32)+ReLU, Linear(32,8)+ReLU
    batch = 4

    key = jax.random.PRNGKey(0)
    key_x, key_p = jax.random.split(key)
    x = jax.random.normal(key_x, (batch, dims[0]), jnp.float32)
    params = init_mlp_params(key_p, dims, weight_dtype=jnp.bfloat16)

    out = jax.block_until_ready(mlp_forward(x, params, dims))

    # Pure-JAX reference with matching numerics (bf16 weights/activations in the
    # matmul, f32 accumulation, f32 bias-add/ReLU) and the same ReLU-after-every-
    # Linear semantics as the provided PyTorch source.
    ref = x
    for ind, (w, b) in enumerate(params):
        ref = jnp.dot(ref.astype(w.dtype), w,
                      preferred_element_type=jnp.float32) + b
        if not (ind >= len(dims) - 1):
            ref = jnp.maximum(ref, 0.0)
    ref = ref.astype(x.dtype)

    assert out.shape == (batch, dims[-1])
    assert jnp.allclose(out, ref, atol=1e-3, rtol=1e-3), (
        "max abs err = %g" % float(jnp.max(jnp.abs(out - ref))))

    print("KERNEL_OK")
</pallas_src>

<mosaic_0001>
module attributes {stable_mosaic.version = 11 : i64} {
  func.func @_fused_mlp_kernel(%arg0: i32, %arg1: memref<4x16xf32, #tpu.memory_space<vmem>>, %arg2: memref<16x32xbf16, #tpu.memory_space<vmem>>, %arg3: memref<1x32xf32, #tpu.memory_space<vmem>>, %arg4: memref<32x8xbf16, #tpu.memory_space<vmem>>, %arg5: memref<1x8xf32, #tpu.memory_space<vmem>>, %arg6: memref<4x8xf32, #tpu.memory_space<vmem>>) attributes {dimension_semantics = [#tpu.dimension_semantics<parallel>], iteration_bounds = array<i64: 1>, scalar_prefetch = 0 : i64, scratch_operands = 0 : i64, tpu.core_type = #tpu.core_type<tc>, window_params = [{transform_indices = @transform_0, window_bounds = array<i64: 4, 16>}, {pipeline_mode = #tpu.pipeline_mode<synchronous>, transform_indices = @transform_1, window_bounds = array<i64: 16, 32>}, {pipeline_mode = #tpu.pipeline_mode<synchronous>, transform_indices = @transform_2, window_bounds = array<i64: 1, 32>}, {pipeline_mode = #tpu.pipeline_mode<synchronous>, transform_indices = @transform_3, window_bounds = array<i64: 32, 8>}, {pipeline_mode = #tpu.pipeline_mode<synchronous>, transform_indices = @transform_4, window_bounds = array<i64: 1, 8>}, {transform_indices = @transform_5, window_bounds = array<i64: 4, 8>}]} {
    %c0 = arith.constant 0 : index
    %c0_0 = arith.constant 0 : index
    %0 = vector.load %arg1[%c0, %c0_0] : memref<4x16xf32, #tpu.memory_space<vmem>>, vector<4x16xf32>
    %c0_1 = arith.constant 0 : index
    %c0_2 = arith.constant 0 : index
    %1 = vector.load %arg2[%c0_1, %c0_2] : memref<16x32xbf16, #tpu.memory_space<vmem>>, vector<16x32xbf16>
    %c0_3 = arith.constant 0 : index
    %c0_4 = arith.constant 0 : index
    %2 = vector.load %arg3[%c0_3, %c0_4] : memref<1x32xf32, #tpu.memory_space<vmem>>, vector<1x32xf32>
    %3 = arith.truncf %0 : vector<4x16xf32> to vector<4x16xbf16>
    %cst = arith.constant dense<0.000000e+00> : vector<4x32xf32>
    %4 = tpu.matmul %3, %1, %cst {dimension_numbers = #tpu.dot_dimension_numbers<[1], [0], [0], [1], [0, 0, 1, 1], [], []>} : vector<4x16xbf16>, vector<16x32xbf16>, vector<4x32xf32> -> vector<4x32xf32>
    %5 = vector.broadcast %2 : vector<1x32xf32> to vector<4x32xf32>
    %6 = arith.addf %4, %5 : vector<4x32xf32>
    %cst_5 = arith.constant 0.000000e+00 : f32
    %7 = vector.broadcast %cst_5 : f32 to vector<4x32xf32>
    %8 = arith.maximumf %6, %7 : vector<4x32xf32>
    %c0_6 = arith.constant 0 : index
    %c0_7 = arith.constant 0 : index
    %9 = vector.load %arg4[%c0_6, %c0_7] : memref<32x8xbf16, #tpu.memory_space<vmem>>, vector<32x8xbf16>
    %c0_8 = arith.constant 0 : index
    %c0_9 = arith.constant 0 : index
    %10 = vector.load %arg5[%c0_8, %c0_9] : memref<1x8xf32, #tpu.memory_space<vmem>>, vector<1x8xf32>
    %11 = arith.truncf %8 : vector<4x32xf32> to vector<4x32xbf16>
    %cst_10 = arith.constant dense<0.000000e+00> : vector<4x8xf32>
    %12 = tpu.matmul %11, %9, %cst_10 {dimension_numbers = #tpu.dot_dimension_numbers<[1], [0], [0], [1], [0, 0, 1, 1], [], []>} : vector<4x32xbf16>, vector<32x8xbf16>, vector<4x8xf32> -> vector<4x8xf32>
    %13 = vector.broadcast %10 : vector<1x8xf32> to vector<4x8xf32>
    %14 = arith.addf %12, %13 : vector<4x8xf32>
    %cst_11 = arith.constant 0.000000e+00 : f32
    %15 = vector.broadcast %cst_11 : f32 to vector<4x8xf32>
    %16 = arith.maximumf %14, %15 : vector<4x8xf32>
    %c0_12 = arith.constant 0 : index
    %c0_13 = arith.constant 0 : index
    %17 = vector.load %arg6[%c0_12, %c0_13] : memref<4x8xf32, #tpu.memory_space<vmem>>, vector<4x8xf32>
    tpu.vector_store %arg6[%c0_12, %c0_13], %16 {strides = array<i32>} : memref<4x8xf32, #tpu.memory_space<vmem>>, vector<4x8xf32>,
    return
  }
  func.func @transform_0(%arg0: i32) -> (i32, i32) {
    %c0_i32 = arith.constant 0 : i32
    %c0_i32_0 = arith.constant 0 : i32
    return %arg0, %c0_i32 : i32, i32
  }
  func.func @transform_1(%arg0: i32) -> (i32, i32) {
    %c0_i32 = arith.constant 0 : i32
    %c0_i32_0 = arith.constant 0 : i32
    %c0_i32_1 = arith.constant 0 : i32
    return %c0_i32, %c0_i32_0 : i32, i32
  }
  func.func @transform_2(%arg0: i32) -> (i32, i32) {
    %c0_i32 = arith.constant 0 : i32
    %c0_i32_0 = arith.constant 0 : i32
    %c0_i32_1 = arith.constant 0 : i32
    return %c0_i32, %c0_i32_0 : i32, i32
  }
  func.func @transform_3(%arg0: i32) -> (i32, i32) {
    %c0_i32 = arith.constant 0 : i32
    %c0_i32_0 = arith.constant 0 : i32
    %c0_i32_1 = arith.constant 0 : i32
    return %c0_i32, %c0_i32_0 : i32, i32
  }
  func.func @transform_4(%arg0: i32) -> (i32, i32) {
    %c0_i32 = arith.constant 0 : i32
    %c0_i32_0 = arith.constant 0 : i32
    %c0_i32_1 = arith.constant 0 : i32
    return %c0_i32, %c0_i32_0 : i32, i32
  }
  func.func @transform_5(%arg0: i32) -> (i32, i32) {
    %c0_i32 = arith.constant 0 : i32
    %c0_i32_0 = arith.constant 0 : i32
    return %arg0, %c0_i32 : i32, i32
  }
}

</mosaic_0001>

<llo_original>
// kernel: tpu_custom_call.1
$region0: #{tpu_custom_call.1}
  #allocation0 [shape = 'u32[]', space=smem, size = 0x4, offset = 0x4, fixed_abs, tag = 'smem constant byte address 0x4 - core index']
  #allocation1 [shape = 'u32[144,128]{1,0:T(1,128)}', space=vmem, size = 0x12000, scoped, tag = 'internal scratch']
  %s0 = inlined_call_operand.vmem [shape: f32[4,16], index: 0, kind: input, shape index: {}]
  %s1 = inlined_call_operand.vmem [shape: bf16[16,32], index: 1, kind: input, shape index: {}]
  %s2 = inlined_call_operand.vmem [shape: f32[1,32], index: 2, kind: input, shape index: {}]
  %s3 = inlined_call_operand.vmem [shape: bf16[32,8], index: 3, kind: input, shape index: {}]
  %s4 = inlined_call_operand.vmem [shape: f32[1,8], index: 4, kind: input, shape index: {}]
  %s5 = inlined_call_operand.hbm [shape: f32[4,8], index: 5, kind: output, shape index: {}]
  %s6 = sld [smem:[#allocation0]]
  $region30: #{tpu_custom_call.1} parent=0
    _
  %s8 = ssub.s32 1, %s6
  %s9 = scalar_select 0, %s8, %s6
  $region1: #{tpu_custom_call.1} parent=0
    #allocation2 [shape = 'u8[2048]{0}', space=vmem, size = 0x800, scoped, tag = 'output window, operand 0, single buffered']
    #allocation3 [shape = 's32[1]{0}', space=sflag, size = 0x4, scoped, tag = 'scoped memory for tpu_custom_call.1']
    %10 = vsyncpa [#allocation3], 0
    // Predicated region
    $region2: #{tpu_custom_call.1} parent=1 // pred_check
      _
    $region3: #{tpu_custom_call.1} parent=1 // pred_check_branch
      %12 = sbr.rel (0) target = $region5
    $region4: #{tpu_custom_call.1} parent=1 // pred_region
      _
    $region5: #{tpu_custom_call.1} parent=1 // pred_fallthru
      _
    // Predicated region
    $region6: #{tpu_custom_call.1} parent=1 // pred_check
      _
    $region7: #{tpu_custom_call.1} parent=1 // pred_check_branch
      %14 = sbr.rel (0) target = $region9
    $region8: #{tpu_custom_call.1} parent=1 // pred_region
      _
    $region9: #{tpu_custom_call.1} parent=1 // pred_fallthru
      _
    // Predicated region
    $region10: #{tpu_custom_call.1} parent=1 // pred_check
      _
    $region11: #{tpu_custom_call.1} parent=1 // pred_check_branch
      %16 = sbr.rel (0) target = $region13
    $region12: #{tpu_custom_call.1} parent=1 // pred_region
      _
    $region13: #{tpu_custom_call.1} parent=1 // pred_fallthru
      _
    // Predicated region
    $region14: #{tpu_custom_call.1} parent=1 // pred_check
      _
    $region15: #{tpu_custom_call.1} parent=1 // pred_check_branch
      %18 = sbr.rel (0) target = $region17
    $region16: #{tpu_custom_call.1} parent=1 // pred_region
      _
    $region17: #{tpu_custom_call.1} parent=1 // pred_fallthru
      _
    // Predicated region
    $region18: #{tpu_custom_call.1} parent=1 // pred_check
      _
    $region19: #{tpu_custom_call.1} parent=1 // pred_check_branch
      %20 = sbr.rel (0) target = $region21
    $region20: #{tpu_custom_call.1} parent=1 // pred_region
      _
    $region21: #{tpu_custom_call.1} parent=1 // pred_fallthru
      _
    %v22 = vld [vmem:[%s0] sm:$0xf]
    %v23 = vld [vmem:[%s1] sm:$0xf]
    %v24 = vld [vmem:[%s1 + $0x4] sm:$0xf]
    %v25 = vld [vmem:[%s2] sm:$0x1]
    %v26 = vpack.c.bf16 %v22, %v22
    %v28 = vlaneseq
    %v29 = vshrl.u32 %v28, 7
    %v30 = vsub.s32 0, %v29
    %v31 = vrot.slane %v25, %v30
    %v35 = vunpack.c.l.b16 %v23
    %v36 = vunpack.c.l.b16 %v24
    %v37 = vpack.c.b16 %v36, %v35
    %vm39 = vcmask 130048
    %v41 = vsel %vm39, %v26, 0
    %43 = vmatprep.subr.bf16.mxu0 0
    %44 = vmatpush1.bf16.msra.mxu0 0
    %45 = vmatprep.subr.bf16.mxu0 0
    %46 = vmatpush1.bf16.msra.mxu0 0
    %47 = vmatprep.subr.bf16.mxu0 0
    %48 = vmatpush1.bf16.msra.mxu0 0
    %49 = vmatprep.subr.bf16.mxu0 0
    %50 = vmatpush1.bf16.msra.mxu0 0
    %51 = vmatprep.subr.bf16.mxu0 0
    %52 = vmatpush1.bf16.msra.mxu0 0
    %53 = vmatprep.subr.bf16.mxu0 0
    %54 = vmatpush1.bf16.msra.mxu0 0
    %55 = vmatprep.subr.bf16.mxu0 0
    %56 = vmatpush1.bf16.msra.mxu0 0
    %57 = vmatprep.subr.bf16.mxu0 0
    %58 = vmatpush1.bf16.msra.mxu0 %v37
    %59 = vmatprep.subr.bf16.mxu0 0
    %60 = vmatpush2.bf16.msra.mxu0 0
    %61 = vmatprep.subr.bf16.mxu0 0
    %62 = vmatpush2.bf16.msra.mxu0 0
    %63 = vmatprep.subr.bf16.mxu0 0
    %64 = vmatpush2.bf16.msra.mxu0 0
    %65 = vmatprep.subr.bf16.mxu0 0
    %66 = vmatpush2.bf16.msra.mxu0 0
    %67 = vmatprep.subr.bf16.mxu0 0
    %68 = vmatpush2.bf16.msra.mxu0 0
    %69 = vmatprep.subr.bf16.mxu0 0
    %70 = vmatpush2.bf16.msra.mxu0 0
    %71 = vmatprep.subr.bf16.mxu0 0
    %72 = vmatpush2.bf16.msra.mxu0 0
    %73 = vmatprep.subr.bf16.mxu0 0
    %74 = vmatpush2.bf16.msra.mxu0 0
    %75 = vmatprep.mubr.bf16.mxu0 0
    %76 = vmatmul.mubr.bf16.gmra.mxu0 %v41
    %v77 = vpop.f32.mrf.mxu0
    %v78 = vadd.f32 %v31, %v77
    %v79 = vpop.f32.mrf.mxu0
    %v80 = vpop.f32.mrf.mxu0
    %v81 = vpop.f32.mrf.mxu0
    %82 = vdwg.mxu0
    %v83 = vmax.f32 %v78, 0.0
    %v84 = vld [vmem:[%s3] sm:$0xf]
    %v85 = vld [vmem:[%s3 + $0x4] sm:$0xf]
    %v86 = vld [vmem:[%s3 + $0x8] sm:$0xf]
    %v87 = vld [vmem:[%s3 + $0xc] sm:$0xf]
    %v88 = vld [vmem:[%s4] sm:$0x1]
    %v89 = vpack.c.bf16 %v83, %v83
    %v91 = vlaneseq
    %v92 = vshrl.u32 %v91, 7
    %v93 = vsub.s32 0, %v92
    %v94 = vrot.slane %v88, %v93
    %v100 = vunpack.c.l.b16 %v84
    %v101 = vunpack.c.l.b16 %v85
    %v102 = vunpack.c.l.b16 %v86
    %v103 = vunpack.c.l.b16 %v87
    %v104 = vpack.c.b16 %v101, %v100
    %v105 = vpack.c.b16 %v103, %v102
    %vm108 = vcmask 261120
    %v110 = vsel %vm108, %v89, 0
    %112 = vmatprep.subr.bf16.mxu0 0
    %113 = vmatpush1.bf16.msra.mxu0 0
    %114 = vmatprep.subr.bf16.mxu0 0
    %115 = vmatpush1.bf16.msra.mxu0 0
    %116 = vmatprep.subr.bf16.mxu0 0
    %117 = vmatpush1.bf16.msra.mxu0 0
    %118 = vmatprep.subr.bf16.mxu0 0
    %119 = vmatpush1.bf16.msra.mxu0 0
    %120 = vmatprep.subr.bf16.mxu0 0
    %121 = vmatpush1.bf16.msra.mxu0 0
    %122 = vmatprep.subr.bf16.mxu0 0
    %123 = vmatpush1.bf16.msra.mxu0 0
    %124 = vmatprep.subr.bf16.mxu0 0
    %125 = vmatpush1.bf16.msra.mxu0 %v105
    %126 = vmatprep.subr.bf16.mxu0 0
    %127 = vmatpush1.bf16.msra.mxu0 %v104
    %128 = vmatprep.subr.bf16.mxu0 0
    %129 = vmatpush2.bf16.msra.mxu0 0
    %130 = vmatprep.subr.bf16.mxu0 0
    %131 = vmatpush2.bf16.msra.mxu0 0
    %132 = vmatprep.subr.bf16.mxu0 0
    %133 = vmatpush2.bf16.msra.mxu0 0
    %134 = vmatprep.subr.bf16.mxu0 0
    %135 = vmatpush2.bf16.msra.mxu0 0
    %136 = vmatprep.subr.bf16.mxu0 0
    %137 = vmatpush2.bf16.msra.mxu0 0
    %138 = vmatprep.subr.bf16.mxu0 0
    %139 = vmatpush2.bf16.msra.mxu0 0
    %140 = vmatprep.subr.bf16.mxu0 0
    %141 = vmatpush2.bf16.msra.mxu0 0
    %142 = vmatprep.subr.bf16.mxu0 0
    %143 = vmatpush2.bf16.msra.mxu0 0
    %144 = vmatprep.mubr.bf16.mxu0 0
    %145 = vmatmul.mubr.bf16.gmra.mxu0 %v110
    %v146 = vpop.f32.mrf.mxu0
    %v147 = vadd.f32 %v94, %v146
    %v148 = vpop.f32.mrf.mxu0
    %v149 = vpop.f32.mrf.mxu0
    %v150 = vpop.f32.mrf.mxu0
    %151 = vdwg.mxu0
    %v152 = vmax.f32 %v147, 0.0
    %vm153 = vcmask 60416
    %154 = vst.msk [vmem:[#allocation2] sm:$0xf] %vm153, %v152
    // Predicated region
    $region22: #{tpu_custom_call.1} parent=1 // pred_check
      _
    $region23: #{tpu_custom_call.1} parent=1 // pred_check_branch
      %156 = sbr.rel (0) target = $region25
    $region24: #{tpu_custom_call.1} parent=1 // pred_region
      %s158 = ssub.s32 64, 64
      %159 = vsyncadd [#allocation3], %s158
      %s161 = sshll.u32 [#allocation2], 4
      %s162 = int_to_ptr.vmem [resolvable:$true] %s161
      %164 = dma.vmem_to_hbm [thread:$0]  %s162, 64, %s5, [#allocation3]
    $region25: #{tpu_custom_call.1} parent=1 // pred_fallthru
      _
    // Predicated region
    $region26: #{tpu_custom_call.1} parent=1 // pred_check
      _
    $region27: #{tpu_custom_call.1} parent=1 // pred_check_branch
      %166 = sbr.rel (0) target = $region29
    $region28: #{tpu_custom_call.1} parent=1 // pred_region
      %167 = dma.done [#allocation3], 64
    $region29: #{tpu_custom_call.1} parent=1 // pred_fallthru
      _
    %168 = vsyncpa [#allocation3], 1

</llo_original>
